<compile_context>
chip_gen: v7x
topology: tpu7x:2x2x1
jax: 0.10.0
libtpu: 0.0.40
codegen_flags: <defaults>
</compile_context>

<pallas_src>
import functools

import jax
import jax.numpy as jnp
from jax import lax
from jax.experimental import pallas as pl
from jax.experimental.pallas import tpu as pltpu


# ----------------------------------------------------------------------------
# Pallas kernel (one batch element per grid step, whole ConvBlock fused)
# ----------------------------------------------------------------------------
def fused_convblock_kernel(x_ref, w1_ref, b1_ref, e_ref, w2_ref, b2_ref, m_ref,
                           o_ref, h1s_ref, *, wp, e_off, h_off, p_out):
    """conv3x3 + bias + ReLU, + emb (broadcast), mask ring, conv3x3 + bias + ReLU.

    x_ref:   (1, Cin_p, Pe)    padded-flat input, zero margin >= wp+1 lanes each side
    w1_ref:  (Cout, 9*Cin_p)   conv1 weight, K-stacked tap-major, bf16
    b1_ref:  (Cout, 1)         conv1 bias, f32
    e_ref:   (1, Cout, 1)      precomputed emb_proj(emb) row for this batch element, f32
    w2_ref:  (Cout, 9*Cout)    conv2 weight, K-stacked tap-major, bf16
    b2_ref:  (Cout, 1)         conv2 bias, f32
    m_ref:   (1, p_out)        1.0 at interior padded-flat positions, 0.0 elsewhere
    o_ref:   (1, Cout, p_out)  lane-dense output (interior sliced outside)
    h1s_ref: (Cout, Pe2)       VMEM scratch holding h1 in an extended flat layout
    """
    shifts = [(ky - 1) * wp + (kx - 1) for ky in range(3) for kx in range(3)]

    # ---- conv1: stack the 9 lane-shifted tap views along the contraction dim ----
    # Each block is (Cin_p, p_out) with Cin_p a multiple of 8 -> tile-aligned concat.
    x_taps = jnp.concatenate(
        [x_ref[0, :, pl.ds(e_off + s, p_out)] for s in shifts], axis=0)
    h1 = jnp.dot(w1_ref[...], x_taps.astype(jnp.bfloat16),
                 preferred_element_type=jnp.float32)              # (Cout, p_out) f32
    h1 = jnp.maximum(h1 + b1_ref[...], 0.0) + e_ref[0]            # ReLU, then +emb
    h1 = h1 * m_ref[...]                                          # re-zero the pad ring

    # Keep h1 resident in VMEM (no HBM round trip).  Only the interior store is needed:
    # interior conv2 outputs only ever read lanes [h_off, h_off + P) which are fully
    # covered; reads outside land only in discarded ring / lane-pad output positions,
    # so the scratch margins never need zeroing (no program_id==0 init either).
    h1s_ref[:, pl.ds(h_off, p_out)] = h1

    # ---- conv2: same K-stacked single matmul, reading h1 straight from VMEM ----
    h_taps = jnp.concatenate(
        [h1s_ref[:, pl.ds(h_off + s, p_out)] for s in shifts], axis=0)
    out = jnp.dot(w2_ref[...], h_taps.astype(jnp.bfloat16),
                  preferred_element_type=jnp.float32)             # (Cout, p_out) f32
    o_ref[0] = jnp.maximum(out + b2_ref[...], 0.0).astype(o_ref.dtype)


# ----------------------------------------------------------------------------
# JAX wrapper
# ----------------------------------------------------------------------------
@jax.jit
def conv_block_forward(x_nchw, emb, w1, b1, w2, b2, w_emb, b_emb):
    """Pallas-backed ConvBlock.forward. x_nchw: (N, Cin, H, W), emb: (N, emb_dim)."""
    N, Cin, H, W = x_nchw.shape
    Cout = w1.shape[0]
    Hp, Wp = H + 2, W + 2
    P = Hp * Wp                              # true padded-flat length (324)
    TAP = Wp + 1                             # max |lane shift| of a 3x3 tap
    P_out = pl.cdiv(P, 128) * 128            # lane-dense output width (384)
    Cin_p = ((Cin + 7) // 8) * 8             # sublane-aligned tap blocks

    # Extended padded-flat input in ONE pad + reshape pass: the extra full zero rows
    # above/below double as the flat-layout margins (>= TAP before, >= P_out-P+TAP after).
    top_rows = -(-TAP // Wp)
    bot_rows = -(-(P_out - P + TAP) // Wp)
    e_off = top_rows * Wp
    Pe = (H + 2 + top_rows + bot_rows) * Wp
    xe = jnp.pad(x_nchw, ((0, 0), (0, Cin_p - Cin),
                          (1 + top_rows, 1 + bot_rows), (1, 1))).reshape(N, Cin_p, Pe)

    # K-stacked tap-major conv weights: w[o,i,ky,kx] -> (o, (ky*3+kx)*C + i), bf16 operands.
    w1p = jnp.pad(w1, ((0, 0), (0, Cin_p - Cin), (0, 0), (0, 0)))
    w1s = jnp.transpose(w1p, (0, 2, 3, 1)).reshape(Cout, 9 * Cin_p).astype(jnp.bfloat16)
    w2s = jnp.transpose(w2, (0, 2, 3, 1)).reshape(Cout, 9 * Cout).astype(jnp.bfloat16)
    b1m = b1.reshape(Cout, 1)
    b2m = b2.reshape(Cout, 1)

    # Hoisted embedding projection: tiny (N, emb) @ (emb, Cout), done once in XLA, f32.
    ev = (emb @ w_emb.T + b_emb).reshape(N, Cout, 1)

    # Interior mask over lane-padded flat positions (1 inside HxW, 0 on ring / lane pad).
    yy, xx = jnp.meshgrid(jnp.arange(Hp), jnp.arange(Wp), indexing="ij")
    interior = ((yy >= 1) & (yy <= H) & (xx >= 1) & (xx <= W)).astype(jnp.float32)
    mask = jnp.pad(interior.reshape(1, P), ((0, 0), (0, P_out - P)))

    h_off = 128                              # lane-aligned interior store into the scratch
    Pe2 = h_off + P_out + 128                # headroom so all tap reads stay in-bounds

    kernel = functools.partial(fused_convblock_kernel, wp=Wp, e_off=e_off,
                               h_off=h_off, p_out=P_out)

    out_flat = pl.pallas_call(
        kernel,
        out_shape=jax.ShapeDtypeStruct((N, Cout, P_out), jnp.float32),
        grid=(N,),
        in_specs=[
            pl.BlockSpec((1, Cin_p, Pe), lambda n: (n, 0, 0)),       # per-step x block
            pl.BlockSpec((Cout, 9 * Cin_p), lambda n: (0, 0)),       # resident weights
            pl.BlockSpec((Cout, 1), lambda n: (0, 0)),
            pl.BlockSpec((1, Cout, 1), lambda n: (n, 0, 0)),         # per-step emb row
            pl.BlockSpec((Cout, 9 * Cout), lambda n: (0, 0)),
            pl.BlockSpec((Cout, 1), lambda n: (0, 0)),
            pl.BlockSpec((1, P_out), lambda n: (0, 0)),              # resident mask
        ],
        out_specs=pl.BlockSpec((1, Cout, P_out), lambda n: (n, 0, 0)),
        scratch_shapes=[pltpu.VMEM((Cout, Pe2), jnp.float32)],
        compiler_params=pltpu.CompilerParams(dimension_semantics=("parallel",)),
    )(xe, w1s, b1m, ev, w2s, b2m, mask)

    # Output is already NCHW-flattened (channels on sublanes, spatial on lanes):
    # drop the lane padding and the conv padding ring; no NHWC->NCHW transpose needed.
    return out_flat[:, :, :P].reshape(N, Cout, Hp, Wp)[:, :, 1:H + 1, 1:W + 1]


# ----------------------------------------------------------------------------
# Pure-JAX reference (mirrors the PyTorch ConvBlock forward exactly).
# conv_dtype=bfloat16 reproduces the kernel's bf16 MXU-operand rounding (f32 accumulate).
# ----------------------------------------------------------------------------
def conv_block_reference(x_nchw, emb, w1, b1, w2, b2, w_emb, b_emb,
                         conv_dtype=jnp.float32):
    dn = ("NCHW", "OIHW", "NCHW")

    def conv(a, w):
        return lax.conv_general_dilated(
            a.astype(conv_dtype), w.astype(conv_dtype), (1, 1), ((1, 1), (1, 1)),
            dimension_numbers=dn, preferred_element_type=jnp.float32,
            precision=lax.Precision.HIGHEST)

    h = conv(x_nchw, w1) + b1[None, :, None, None]
    h = jnp.maximum(h, 0.0)
    e = emb @ w_emb.T + b_emb                                # (N, Cout)
    h = h + e[:, :, None, None]
    h = conv(h, w2) + b2[None, :, None, None]
    return jnp.maximum(h, 0.0)


# ----------------------------------------------------------------------------
# Main
# ----------------------------------------------------------------------------
if __name__ == "__main__":
    N, Cin, Cout, H, W, EMB = 2, 4, 8, 16, 16, 32

    key = jax.random.PRNGKey(0)
    ks = jax.random.split(key, 8)

    # Deterministic synthetic parameters (shapes per nn.Conv2d / nn.Linear).
    w1 = jax.random.normal(ks[0], (Cout, Cin, 3, 3), jnp.float32) * 0.1
    b1 = jax.random.normal(ks[1], (Cout,), jnp.float32) * 0.1
    w2 = jax.random.normal(ks[2], (Cout, Cout, 3, 3), jnp.float32) * 0.1
    b2 = jax.random.normal(ks[3], (Cout,), jnp.float32) * 0.1
    w_emb = jax.random.normal(ks[4], (Cout, EMB), jnp.float32) * 0.1
    b_emb = jax.random.normal(ks[5], (Cout,), jnp.float32) * 0.1

    # Inputs.
    x = jax.random.normal(ks[6], (N, Cin, H, W), jnp.float32)
    emb = jax.random.normal(ks[7], (N, EMB), jnp.float32)

    out = jax.block_until_ready(conv_block_forward(x, emb, w1, b1, w2, b2, w_emb, b_emb))
    assert out.shape == (N, Cout, H, W), out.shape

    # Primary check: reference with identical bf16 MXU-operand rounding, f32 accumulation.
    ref_bf16 = jax.block_until_ready(
        conv_block_reference(x, emb, w1, b1, w2, b2, w_emb, b_emb,
                             conv_dtype=jnp.bfloat16))
    err_bf16 = float(jnp.max(jnp.abs(out - ref_bf16)))
    assert err_bf16 < 5e-3, f"max abs error vs bf16-operand reference {err_bf16}"

    # Sanity check vs the full-f32 reference (gap bounded by bf16 operand rounding).
    ref_f32 = jax.block_until_ready(
        conv_block_reference(x, emb, w1, b1, w2, b2, w_emb, b_emb))
    err_f32 = float(jnp.max(jnp.abs(out - ref_f32)))
    assert err_f32 < 5e-2, f"max abs error vs f32 reference {err_f32}"

    # TODO(synk): LDDPM.forward's elided pieces (VAE encode, timestep sampling,
    # q-sample noise add, MSE loss) are `...` in the spec and are not kernelized here.
    print("KERNEL_OK")
</pallas_src>

<mosaic_0001>
module attributes {stable_mosaic.version = 11 : i64} {
  func.func @fused_convblock_kernel(%arg0: i32, %arg1: memref<1x8x450xf32, #tpu.memory_space<vmem>>, %arg2: memref<8x72xbf16, #tpu.memory_space<vmem>>, %arg3: memref<8x1xf32, #tpu.memory_space<vmem>>, %arg4: memref<1x8x1xf32, #tpu.memory_space<vmem>>, %arg5: memref<8x72xbf16, #tpu.memory_space<vmem>>, %arg6: memref<8x1xf32, #tpu.memory_space<vmem>>, %arg7: memref<1x384xf32, #tpu.memory_space<vmem>>, %arg8: memref<1x8x384xf32, #tpu.memory_space<vmem>>, %arg9: memref<8x640xf32, #tpu.memory_space<vmem>>) attributes {dimension_semantics = [#tpu.dimension_semantics<parallel>], iteration_bounds = array<i64: 2>, scalar_prefetch = 0 : i64, scratch_operands = 1 : i64, tpu.core_type = #tpu.core_type<tc>, window_params = [{transform_indices = @transform_0, window_bounds = array<i64: 1, 8, 450>}, {pipeline_mode = #tpu.pipeline_mode<synchronous>, transform_indices = @transform_1, window_bounds = array<i64: 8, 72>}, {pipeline_mode = #tpu.pipeline_mode<synchronous>, transform_indices = @transform_2, window_bounds = array<i64: 8, 1>}, {transform_indices = @transform_3, window_bounds = array<i64: 1, 8, 1>}, {pipeline_mode = #tpu.pipeline_mode<synchronous>, transform_indices = @transform_4, window_bounds = array<i64: 8, 72>}, {pipeline_mode = #tpu.pipeline_mode<synchronous>, transform_indices = @transform_5, window_bounds = array<i64: 8, 1>}, {pipeline_mode = #tpu.pipeline_mode<synchronous>, transform_indices = @transform_6, window_bounds = array<i64: 1, 384>}, {transform_indices = @transform_7, window_bounds = array<i64: 1, 8, 384>}]} {
    %c0 = arith.constant 0 : index
    %c0_0 = arith.constant 0 : index
    %c17 = arith.constant 17 : index
    %0 = vector.load %arg1[%c0, %c0_0, %c17] : memref<1x8x450xf32, #tpu.memory_space<vmem>>, vector<1x8x384xf32>
    %1 = vector.shape_cast %0 : vector<1x8x384xf32> to vector<8x384xf32>
    %c0_1 = arith.constant 0 : index
    %c0_2 = arith.constant 0 : index
    %c18 = arith.constant 18 : index
    %2 = vector.load %arg1[%c0_1, %c0_2, %c18] : memref<1x8x450xf32, #tpu.memory_space<vmem>>, vector<1x8x384xf32>
    %3 = vector.shape_cast %2 : vector<1x8x384xf32> to vector<8x384xf32>
    %c0_3 = arith.constant 0 : index
    %c0_4 = arith.constant 0 : index
    %c19 = arith.constant 19 : index
    %4 = vector.load %arg1[%c0_3, %c0_4, %c19] : memref<1x8x450xf32, #tpu.memory_space<vmem>>, vector<1x8x384xf32>
    %5 = vector.shape_cast %4 : vector<1x8x384xf32> to vector<8x384xf32>
    %c0_5 = arith.constant 0 : index
    %c0_6 = arith.constant 0 : index
    %c35 = arith.constant 35 : index
    %6 = vector.load %arg1[%c0_5, %c0_6, %c35] : memref<1x8x450xf32, #tpu.memory_space<vmem>>, vector<1x8x384xf32>
    %7 = vector.shape_cast %6 : vector<1x8x384xf32> to vector<8x384xf32>
    %c0_7 = arith.constant 0 : index
    %c0_8 = arith.constant 0 : index
    %c36 = arith.constant 36 : index
    %8 = vector.load %arg1[%c0_7, %c0_8, %c36] : memref<1x8x450xf32, #tpu.memory_space<vmem>>, vector<1x8x384xf32>
    %9 = vector.shape_cast %8 : vector<1x8x384xf32> to vector<8x384xf32>
    %c0_9 = arith.constant 0 : index
    %c0_10 = arith.constant 0 : index
    %c37 = arith.constant 37 : index
    %10 = vector.load %arg1[%c0_9, %c0_10, %c37] : memref<1x8x450xf32, #tpu.memory_space<vmem>>, vector<1x8x384xf32>
    %11 = vector.shape_cast %10 : vector<1x8x384xf32> to vector<8x384xf32>
    %c0_11 = arith.constant 0 : index
    %c0_12 = arith.constant 0 : index
    %c53 = arith.constant 53 : index
    %12 = vector.load %arg1[%c0_11, %c0_12, %c53] : memref<1x8x450xf32, #tpu.memory_space<vmem>>, vector<1x8x384xf32>
    %13 = vector.shape_cast %12 : vector<1x8x384xf32> to vector<8x384xf32>
    %c0_13 = arith.constant 0 : index
    %c0_14 = arith.constant 0 : index
    %c54 = arith.constant 54 : index
    %14 = vector.load %arg1[%c0_13, %c0_14, %c54] : memref<1x8x450xf32, #tpu.memory_space<vmem>>, vector<1x8x384xf32>
    %15 = vector.shape_cast %14 : vector<1x8x384xf32> to vector<8x384xf32>
    %c0_15 = arith.constant 0 : index
    %c0_16 = arith.constant 0 : index
    %c55 = arith.constant 55 : index
    %16 = vector.load %arg1[%c0_15, %c0_16, %c55] : memref<1x8x450xf32, #tpu.memory_space<vmem>>, vector<1x8x384xf32>
    %17 = vector.shape_cast %16 : vector<1x8x384xf32> to vector<8x384xf32>
    %18 = tpu.concatenate %1, %3, %5, %7, %9, %11, %13, %15, %17 in 0 : vector<8x384xf32>, vector<8x384xf32>, vector<8x384xf32>, vector<8x384xf32>, vector<8x384xf32>, vector<8x384xf32>, vector<8x384xf32>, vector<8x384xf32>, vector<8x384xf32> -> vector<72x384xf32>
    %c0_17 = arith.constant 0 : index
    %c0_18 = arith.constant 0 : index
    %19 = vector.load %arg2[%c0_17, %c0_18] : memref<8x72xbf16, #tpu.memory_space<vmem>>, vector<8x72xbf16>
    %20 = arith.truncf %18 : vector<72x384xf32> to vector<72x384xbf16>
    %cst = arith.constant dense<0.000000e+00> : vector<8x384xf32>
    %21 = tpu.matmul %19, %20, %cst {dimension_numbers = #tpu.dot_dimension_numbers<[1], [0], [0], [1], [0, 0, 1, 1], [], []>} : vector<8x72xbf16>, vector<72x384xbf16>, vector<8x384xf32> -> vector<8x384xf32>
    %c0_19 = arith.constant 0 : index
    %c0_20 = arith.constant 0 : index
    %22 = vector.load %arg3[%c0_19, %c0_20] : memref<8x1xf32, #tpu.memory_space<vmem>>, vector<8x1xf32>
    %23 = vector.broadcast %22 : vector<8x1xf32> to vector<8x384xf32>
    %24 = arith.addf %21, %23 : vector<8x384xf32>
    %cst_21 = arith.constant 0.000000e+00 : f32
    %25 = vector.broadcast %cst_21 : f32 to vector<8x384xf32>
    %26 = arith.maximumf %24, %25 : vector<8x384xf32>
    %c0_22 = arith.constant 0 : index
    %c0_23 = arith.constant 0 : index
    %c0_24 = arith.constant 0 : index
    %27 = vector.load %arg4[%c0_22, %c0_23, %c0_24] : memref<1x8x1xf32, #tpu.memory_space<vmem>>, vector<1x8x1xf32>
    %28 = vector.shape_cast %27 : vector<1x8x1xf32> to vector<8x1xf32>
    %29 = vector.broadcast %28 : vector<8x1xf32> to vector<8x384xf32>
    %30 = arith.addf %26, %29 : vector<8x384xf32>
    %c0_25 = arith.constant 0 : index
    %c0_26 = arith.constant 0 : index
    %31 = vector.load %arg7[%c0_25, %c0_26] : memref<1x384xf32, #tpu.memory_space<vmem>>, vector<1x384xf32>
    %32 = vector.broadcast %31 : vector<1x384xf32> to vector<8x384xf32>
    %33 = arith.mulf %30, %32 : vector<8x384xf32>
    %c0_27 = arith.constant 0 : index
    %c128 = arith.constant 128 : index
    %34 = vector.load %arg9[%c0_27, %c128] : memref<8x640xf32, #tpu.memory_space<vmem>>, vector<8x384xf32>
    tpu.vector_store %arg9[%c0_27, %c128], %33 {strides = array<i32>} : memref<8x640xf32, #tpu.memory_space<vmem>>, vector<8x384xf32>,
    %c0_28 = arith.constant 0 : index
    %c109 = arith.constant 109 : index
    %35 = vector.load %arg9[%c0_28, %c109] : memref<8x640xf32, #tpu.memory_space<vmem>>, vector<8x384xf32>
    %c0_29 = arith.constant 0 : index
    %c110 = arith.constant 110 : index
    %36 = vector.load %arg9[%c0_29, %c110] : memref<8x640xf32, #tpu.memory_space<vmem>>, vector<8x384xf32>
    %c0_30 = arith.constant 0 : index
    %c111 = arith.constant 111 : index
    %37 = vector.load %arg9[%c0_30, %c111] : memref<8x640xf32, #tpu.memory_space<vmem>>, vector<8x384xf32>
    %c0_31 = arith.constant 0 : index
    %c127 = arith.constant 127 : index
    %38 = vector.load %arg9[%c0_31, %c127] : memref<8x640xf32, #tpu.memory_space<vmem>>, vector<8x384xf32>
    %c0_32 = arith.constant 0 : index
    %c128_33 = arith.constant 128 : index
    %39 = vector.load %arg9[%c0_32, %c128_33] : memref<8x640xf32, #tpu.memory_space<vmem>>, vector<8x384xf32>
    %c0_34 = arith.constant 0 : index
    %c129 = arith.constant 129 : index
    %40 = vector.load %arg9[%c0_34, %c129] : memref<8x640xf32, #tpu.memory_space<vmem>>, vector<8x384xf32>
    %c0_35 = arith.constant 0 : index
    %c145 = arith.constant 145 : index
    %41 = vector.load %arg9[%c0_35, %c145] : memref<8x640xf32, #tpu.memory_space<vmem>>, vector<8x384xf32>
    %c0_36 = arith.constant 0 : index
    %c146 = arith.constant 146 : index
    %42 = vector.load %arg9[%c0_36, %c146] : memref<8x640xf32, #tpu.memory_space<vmem>>, vector<8x384xf32>
    %c0_37 = arith.constant 0 : index
    %c147 = arith.constant 147 : index
    %43 = vector.load %arg9[%c0_37, %c147] : memref<8x640xf32, #tpu.memory_space<vmem>>, vector<8x384xf32>
    %44 = tpu.concatenate %35, %36, %37, %38, %39, %40, %41, %42, %43 in 0 : vector<8x384xf32>, vector<8x384xf32>, vector<8x384xf32>, vector<8x384xf32>, vector<8x384xf32>, vector<8x384xf32>, vector<8x384xf32>, vector<8x384xf32>, vector<8x384xf32> -> vector<72x384xf32>
    %c0_38 = arith.constant 0 : index
    %c0_39 = arith.constant 0 : index
    %45 = vector.load %arg5[%c0_38, %c0_39] : memref<8x72xbf16, #tpu.memory_space<vmem>>, vector<8x72xbf16>
    %46 = arith.truncf %44 : vector<72x384xf32> to vector<72x384xbf16>
    %cst_40 = arith.constant dense<0.000000e+00> : vector<8x384xf32>
    %47 = tpu.matmul %45, %46, %cst_40 {dimension_numbers = #tpu.dot_dimension_numbers<[1], [0], [0], [1], [0, 0, 1, 1], [], []>} : vector<8x72xbf16>, vector<72x384xbf16>, vector<8x384xf32> -> vector<8x384xf32>
    %c0_41 = arith.constant 0 : index
    %c0_42 = arith.constant 0 : index
    %48 = vector.load %arg6[%c0_41, %c0_42] : memref<8x1xf32, #tpu.memory_space<vmem>>, vector<8x1xf32>
    %49 = vector.broadcast %48 : vector<8x1xf32> to vector<8x384xf32>
    %50 = arith.addf %47, %49 : vector<8x384xf32>
    %cst_43 = arith.constant 0.000000e+00 : f32
    %51 = vector.broadcast %cst_43 : f32 to vector<8x384xf32>
    %52 = arith.maximumf %50, %51 : vector<8x384xf32>
    %c0_44 = arith.constant 0 : index
    %c0_45 = arith.constant 0 : index
    %c0_46 = arith.constant 0 : index
    %53 = vector.load %arg8[%c0_44, %c0_45, %c0_46] : memref<1x8x384xf32, #tpu.memory_space<vmem>>, vector<1x8x384xf32>
    %54 = vector.shape_cast %53 : vector<1x8x384xf32> to vector<8x384xf32>
    %55 = vector.shape_cast %52 : vector<8x384xf32> to vector<1x8x384xf32>
    tpu.vector_store %arg8[%c0_44, %c0_45, %c0_46], %55 {strides = array<i32>} : memref<1x8x384xf32, #tpu.memory_space<vmem>>, vector<1x8x384xf32>,
    return
  }
  func.func @transform_0(%arg0: i32) -> (i32, i32, i32) {
    %c0_i32 = arith.constant 0 : i32
    %c0_i32_0 = arith.constant 0 : i32
    %c0_i32_1 = arith.constant 0 : i32
    return %arg0, %c0_i32, %c0_i32_0 : i32, i32, i32
  }
  func.func @transform_1(%arg0: i32) -> (i32, i32) {
    %c0_i32 = arith.constant 0 : i32
    %c0_i32_0 = arith.constant 0 : i32
    %c0_i32_1 = arith.constant 0 : i32
    return %c0_i32, %c0_i32_0 : i32, i32
  }
  func.func @transform_2(%arg0: i32) -> (i32, i32) {
    %c0_i32 = arith.constant 0 : i32
    %c0_i32_0 = arith.constant 0 : i32
    %c0_i32_1 = arith.constant 0 : i32
    return %c0_i32, %c0_i32_0 : i32, i32
  }
  func.func @transform_3(%arg0: i32) -> (i32, i32, i32) {
    %c0_i32 = arith.constant 0 : i32
    %c0_i32_0 = arith.constant 0 : i32
    %c0_i32_1 = arith.constant 0 : i32
    return %arg0, %c0_i32, %c0_i32_0 : i32, i32, i32
  }
  func.func @transform_4(%arg0: i32) -> (i32, i32) {
    %c0_i32 = arith.constant 0 : i32
    %c0_i32_0 = arith.constant 0 : i32
    %c0_i32_1 = arith.constant 0 : i32
    return %c0_i32, %c0_i32_0 : i32, i32
  }
  func.func @transform_5(%arg0: i32) -> (i32, i32) {
    %c0_i32 = arith.constant 0 : i32
    %c0_i32_0 = arith.constant 0 : i32
    %c0_i32_1 = arith.constant 0 : i32
    return %c0_i32, %c0_i32_0 : i32, i32
  }
  func.func @transform_6(%arg0: i32) -> (i32, i32) {
    %c0_i32 = arith.constant 0 : i32
    %c0_i32_0 = arith.constant 0 : i32
    %c0_i32_1 = arith.constant 0 : i32
    return %c0_i32, %c0_i32_0 : i32, i32
  }
  func.func @transform_7(%arg0: i32) -> (i32, i32, i32) {
    %c0_i32 = arith.constant 0 : i32
    %c0_i32_0 = arith.constant 0 : i32
    %c0_i32_1 = arith.constant 0 : i32
    return %arg0, %c0_i32, %c0_i32_0 : i32, i32, i32
  }
}

</mosaic_0001>

<llo_original>
// kernel: conv_block_forward.1
$region0: #{conv_block_forward.1}
  #allocation0 [shape = 'u32[]', space=smem, size = 0x4, offset = 0x4, fixed_abs, tag = 'smem constant byte address 0x4 - core index']
  #allocation1 [shape = 'u32[144,128]{1,0:T(1,128)}', space=vmem, size = 0x12000, scoped, tag = 'internal scratch']
  #allocation2 [shape = 'f32[8,640]{1,0:T(8,128)}', space=vmem, size = 0x5000, scoped, tag = 'scratch operand']
  %s0 = inlined_call_operand.vmem [shape: f32[2,8,450], index: 0, kind: input, shape index: {}]
  %s1 = inlined_call_operand.vmem [shape: bf16[8,72], index: 1, kind: input, shape index: {}]
  %s2 = inlined_call_operand.vmem [shape: f32[8,1], index: 2, kind: input, shape index: {}]
  %s3 = inlined_call_operand.vmem [shape: f32[2,8,1], index: 3, kind: input, shape index: {}]
  %s4 = inlined_call_operand.vmem [shape: bf16[8,72], index: 4, kind: input, shape index: {}]
  %s5 = inlined_call_operand.vmem [shape: f32[8,1], index: 5, kind: input, shape index: {}]
  %s6 = inlined_call_operand.vmem [shape: f32[1,384], index: 6, kind: input, shape index: {}]
  %s7 = inlined_call_operand.vmem [shape: f32[2,8,384], index: 7, kind: output, shape index: {}]
  %s8 = sld [smem:[#allocation0]]
  $region61: #{conv_block_forward.1} parent=0
    _
  %s10 = ssub.s32 1, %s8
  %s11 = scalar_select 0, %s10, %s8
  loop: start=0, step=1, limit=4
  $region2: #{conv_block_forward.1} parent=0 // loop_pre_header
    _
  $region3: #{conv_block_forward.1} parent=0 // loop_header
    %s13 = sphi 0, %s17
    %p14 = scmp.ge.s32.totalorder %s13, 4
    %s23 = sphi 0, %s25
    %s26 = sphi 0, %s23
    %s27 = sphi 0, %s26
    %s43 = sphi 0, %s27
    %s47 = sphi 0, %s47
    %s49 = sphi 0, %s47
    %s50 = sphi 0, %s49
    %s64 = sphi 0, %s50
    %s68 = sphi 0, %s68
    %s70 = sphi 0, %s68
    %s71 = sphi 0, %s70
    %s85 = sphi 0, %s71
    %s91 = sphi 0, %s93
    %s94 = sphi 0, %s91
    %s95 = sphi 0, %s94
    %s111 = sphi 0, %s95
    %s115 = sphi 0, %s115
    %s117 = sphi 0, %s115
    %s118 = sphi 0, %s117
    %s132 = sphi 0, %s118
    %s136 = sphi 0, %s136
    %s138 = sphi 0, %s136
    %s139 = sphi 0, %s138
    %s153 = sphi 0, %s139
    %s157 = sphi 0, %s157
    %s159 = sphi 0, %s157
    %s160 = sphi 0, %s159
    %s174 = sphi 0, %s160
    %s180 = sphi 0, %s182
    %s183 = sphi 0, %s180
    %s184 = sphi 0, %s183
    %s200 = sphi 0, %s184
  $region4: #{conv_block_forward.1} parent=0 // loop_header_branch
    %16 = sbr.rel (%p14) target = $region8
  $region5: #{conv_block_forward.1} parent=0 // loop_body
    %s18 = ssub.s32 %s13, 1
    %s19 = ssub.s32 %s13, 2
    %s20 = sadd.s32 %s13, 1
    %s21 = ssub.s32 %s13, %s20
    %p22 = scmp.eq.s32.totalorder %s21, 0
    %s24 = sadd.s32 %s23, 1
    %s25 = scalar_select %p22, %s23, %s24
    %p28 = pneg %p22
    %p29 = scmp.eq.s32.totalorder %s13, 1
    %p30 = por %p28, %p29
    %p31 = scmp.ne.s32.totalorder %s23, %s26
    %p32 = scmp.eq.s32.totalorder %s13, 0
    %p33 = por %p31, %p32
    %p34 = scmp.ne.s32.totalorder %s23, %s26
    %p35 = scmp.eq.s32.totalorder %s18, 1
    %p36 = por %p34, %p35
    %p37 = scmp.ne.s32.totalorder %s26, %s27
    %p38 = scmp.eq.s32.totalorder %s18, 0
    %p39 = por %p37, %p38
    %p40 = scmp.ne.s32.totalorder %s26, %s27
    %p41 = scmp.eq.s32.totalorder %s19, 1
    %p42 = por %p40, %p41
    %p44 = scmp.ne.s32.totalorder %s27, %s43
    %p45 = scmp.eq.s32.totalorder %s19, 0
    %p46 = por %p44, %p45
    %s48 = sadd.s32 %s47, 1
    %p51 = scmp.eq.s32.totalorder %s13, 1
    %p52 = scmp.ne.s32.totalorder %s47, %s49
    %p53 = scmp.eq.s32.totalorder %s13, 0
    %p54 = por %p52, %p53
    %p55 = scmp.ne.s32.totalorder %s47, %s49
    %p56 = scmp.eq.s32.totalorder %s18, 1
    %p57 = por %p55, %p56
    %p58 = scmp.ne.s32.totalorder %s49, %s50
    %p59 = scmp.eq.s32.totalorder %s18, 0
    %p60 = por %p58, %p59
    %p61 = scmp.ne.s32.totalorder %s49, %s50
    %p62 = scmp.eq.s32.totalorder %s19, 1
    %p63 = por %p61, %p62
    %p65 = scmp.ne.s32.totalorder %s50, %s64
    %p66 = scmp.eq.s32.totalorder %s19, 0
    %p67 = por %p65, %p66
    %s69 = sadd.s32 %s68, 1
    %p72 = scmp.eq.s32.totalorder %s13, 1
    %p73 = scmp.ne.s32.totalorder %s68, %s70
    %p74 = scmp.eq.s32.totalorder %s13, 0
    %p75 = por %p73, %p74
    %p76 = scmp.ne.s32.totalorder %s68, %s70
    %p77 = scmp.eq.s32.totalorder %s18, 1
    %p78 = por %p76, %p77
    %p79 = scmp.ne.s32.totalorder %s70, %s71
    %p80 = scmp.eq.s32.totalorder %s18, 0
    %p81 = por %p79, %p80
    %p82 = scmp.ne.s32.totalorder %s70, %s71
    %p83 = scmp.eq.s32.totalorder %s19, 1
    %p84 = por %p82, %p83
    %p86 = scmp.ne.s32.totalorder %s71, %s85
    %p87 = scmp.eq.s32.totalorder %s19, 0
    %p88 = por %p86, %p87
    %s89 = ssub.s32 %s13, %s20
    %p90 = scmp.eq.s32.totalorder %s89, 0
    %s92 = sadd.s32 %s91, 1
    %s93 = scalar_select %p90, %s91, %s92
    %p96 = pneg %p90
    %p97 = scmp.eq.s32.totalorder %s13, 1
    %p98 = por %p96, %p97
    %p99 = scmp.ne.s32.totalorder %s91, %s94
    %p100 = scmp.eq.s32.totalorder %s13, 0
    %p101 = por %p99, %p100
    %p102 = scmp.ne.s32.totalorder %s91, %s94
    %p103 = scmp.eq.s32.totalorder %s18, 1
    %p104 = por %p102, %p103
    %p105 = scmp.ne.s32.totalorder %s94, %s95
    %p106 = scmp.eq.s32.totalorder %s18, 0
    %p107 = por %p105, %p106
    %p108 = scmp.ne.s32.totalorder %s94, %s95
    %p109 = scmp.eq.s32.totalorder %s19, 1
    %p110 = por %p108, %p109
    %p112 = scmp.ne.s32.totalorder %s95, %s111
    %p113 = scmp.eq.s32.totalorder %s19, 0
    %p114 = por %p112, %p113
    %s116 = sadd.s32 %s115, 1
    %p119 = scmp.eq.s32.totalorder %s13, 1
    %p120 = scmp.ne.s32.totalorder %s115, %s117
    %p121 = scmp.eq.s32.totalorder %s13, 0
    %p122 = por %p120, %p121
    %p123 = scmp.ne.s32.totalorder %s115, %s117
    %p124 = scmp.eq.s32.totalorder %s18, 1
    %p125 = por %p123, %p124
    %p126 = scmp.ne.s32.totalorder %s117, %s118
    %p127 = scmp.eq.s32.totalorder %s18, 0
    %p128 = por %p126, %p127
    %p129 = scmp.ne.s32.totalorder %s117, %s118
    %p130 = scmp.eq.s32.totalorder %s19, 1
    %p131 = por %p129, %p130
    %p133 = scmp.ne.s32.totalorder %s118, %s132
    %p134 = scmp.eq.s32.totalorder %s19, 0
    %p135 = por %p133, %p134
    %s137 = sadd.s32 %s136, 1
    %p140 = scmp.eq.s32.totalorder %s13, 1
    %p141 = scmp.ne.s32.totalorder %s136, %s138
    %p142 = scmp.eq.s32.totalorder %s13, 0
    %p143 = por %p141, %p142
    %p144 = scmp.ne.s32.totalorder %s136, %s138
    %p145 = scmp.eq.s32.totalorder %s18, 1
    %p146 = por %p144, %p145
    %p147 = scmp.ne.s32.totalorder %s138, %s139
    %p148 = scmp.eq.s32.totalorder %s18, 0
    %p149 = por %p147, %p148
    %p150 = scmp.ne.s32.totalorder %s138, %s139
    %p151 = scmp.eq.s32.totalorder %s19, 1
    %p152 = por %p150, %p151
    %p154 = scmp.ne.s32.totalorder %s139, %s153
    %p155 = scmp.eq.s32.totalorder %s19, 0
    %p156 = por %p154, %p155
    %s158 = sadd.s32 %s157, 1
    %p161 = scmp.eq.s32.totalorder %s13, 1
    %p162 = scmp.ne.s32.totalorder %s157, %s159
    %p163 = scmp.eq.s32.totalorder %s13, 0
    %p164 = por %p162, %p163
    %p165 = scmp.ne.s32.totalorder %s157, %s159
    %p166 = scmp.eq.s32.totalorder %s18, 1
    %p167 = por %p165, %p166
    %p168 = scmp.ne.s32.totalorder %s159, %s160
    %p169 = scmp.eq.s32.totalorder %s18, 0
    %p170 = por %p168, %p169
    %p171 = scmp.ne.s32.totalorder %s159, %s160
    %p172 = scmp.eq.s32.totalorder %s19, 1
    %p173 = por %p171, %p172
    %p175 = scmp.ne.s32.totalorder %s160, %s174
    %p176 = scmp.eq.s32.totalorder %s19, 0
    %p177 = por %p175, %p176
    %s178 = ssub.s32 %s13, %s20
    %p179 = scmp.eq.s32.totalorder %s178, 0
    %s181 = sadd.s32 %s180, 1
    %s182 = scalar_select %p179, %s180, %s181
    %p185 = pneg %p179
    %p186 = scmp.eq.s32.totalorder %s13, 1
    %p187 = por %p185, %p186
    %p188 = scmp.ne.s32.totalorder %s180, %s183
    %p189 = scmp.eq.s32.totalorder %s13, 0
    %p190 = por %p188, %p189
    %p191 = scmp.ne.s32.totalorder %s180, %s183
    %p192 = scmp.eq.s32.totalorder %s18, 1
    %p193 = por %p191, %p192
    %p194 = scmp.ne.s32.totalorder %s183, %s184
    %p195 = scmp.eq.s32.totalorder %s18, 0
    %p196 = por %p194, %p195
    %p197 = scmp.ne.s32.totalorder %s183, %s184
    %p198 = scmp.eq.s32.totalorder %s19, 1
    %p199 = por %p197, %p198
    %p201 = scmp.ne.s32.totalorder %s184, %s200
    %p202 = scmp.eq.s32.totalorder %s19, 0
    %p203 = por %p201, %p202
    %p204 = scmp.le.s32.totalorder 1, %s13
    %p205 = scmp.lt.s32.totalorder %s13, 3
    %p206 = pnand %p204, %p205
    %p207 = pneg %p206
    // Predicated region
    $region9: #{conv_block_forward.1} parent=5 // pred_check
      _
    $region10: #{conv_block_forward.1} parent=5 // pred_check_branch
      %209 = sbr.rel (%p206) target = $region12
    $region11: #{conv_block_forward.1} parent=5 // pred_region
      %s210 = ssub.s32 %s13, 1
      // Predicated region
      $region13: #{conv_block_forward.1} parent=11 // pred_check
        %p211 = pneg %p60
      $region14: #{conv_block_forward.1} parent=11 // pred_check_branch
        %213 = sbr.rel (%p211) target = $region16
      $region15: #{conv_block_forward.1} parent=11 // pred_region
        _
      $region16: #{conv_block_forward.1} parent=11 // pred_fallthru
        _
      // Predicated region
      $region17: #{conv_block_forward.1} parent=11 // pred_check
        %p214 = pneg %p81
      $region18: #{conv_block_forward.1} parent=11 // pred_check_branch
        %216 = sbr.rel (%p214) target = $region20
      $region19: #{conv_block_forward.1} parent=11 // pred_region
        _
      $region20: #{conv_block_forward.1} parent=11 // pred_fallthru
        _
      // Predicated region
      $region21: #{conv_block_forward.1} parent=11 // pred_check
        %p217 = pneg %p128
      $region22: #{conv_block_forward.1} parent=11 // pred_check_branch
        %219 = sbr.rel (%p217) target = $region24
      $region23: #{conv_block_forward.1} parent=11 // pred_region
        _
      $region24: #{conv_block_forward.1} parent=11 // pred_fallthru
        _
      // Predicated region
      $region25: #{conv_block_forward.1} parent=11 // pred_check
        %p220 = pneg %p149
      $region26: #{conv_block_forward.1} parent=11 // pred_check_branch
        %222 = sbr.rel (%p220) target = $region28
      $region27: #{conv_block_forward.1} parent=11 // pred_region
        _
      $region28: #{conv_block_forward.1} parent=11 // pred_fallthru
        _
      // Predicated region
      $region29: #{conv_block_forward.1} parent=11 // pred_check
        %p223 = pneg %p170
      $region30: #{conv_block_forward.1} parent=11 // pred_check_branch
        %225 = sbr.rel (%p223) target = $region32
      $region31: #{conv_block_forward.1} parent=11 // pred_region
        _
      $region32: #{conv_block_forward.1} parent=11 // pred_fallthru
        _
    $region12: #{conv_block_forward.1} parent=5 // pred_fallthru
      _
    %p226 = scmp.lt.s32.totalorder %s13, 2
    // Predicated region
    $region33: #{conv_block_forward.1} parent=5 // pred_check
      %p227 = pneg %p226
    $region34: #{conv_block_forward.1} parent=5 // pred_check_branch
      %229 = sbr.rel (%p227) target = $region36
    $region35: #{conv_block_forward.1} parent=5 // pred_region
      // Predicated region
      $region37: #{conv_block_forward.1} parent=35 // pred_check
        %p230 = pneg %p33
      $region38: #{conv_block_forward.1} parent=35 // pred_check_branch
        %232 = sbr.rel (%p230) target = $region40
      $region39: #{conv_block_forward.1} parent=35 // pred_region
        %p233 = scmp.lt.s32.totalorder %s13, 1
        %s234 = scalar_select %p233, %s13, 1
        %s235 = smul.addr %s234, 4
        %s236 = smul.addr %s235, 8
        %s237 = scalar_lea.vmem %s0, %s236
      $region40: #{conv_block_forward.1} parent=35 // pred_fallthru
        _
      // Predicated region
      $region41: #{conv_block_forward.1} parent=35 // pred_check
        %p238 = pneg %p101
      $region42: #{conv_block_forward.1} parent=35 // pred_check_branch
        %240 = sbr.rel (%p238) target = $region44
      $region43: #{conv_block_forward.1} parent=35 // pred_region
        %p241 = scmp.lt.s32.totalorder %s13, 1
        %s242 = scalar_select %p241, %s13, 1
        %s243 = smul.addr %s242, 8
        %s244 = scalar_lea.vmem %s3, %s243
      $region44: #{conv_block_forward.1} parent=35 // pred_fallthru
        _
    $region36: #{conv_block_forward.1} parent=5 // pred_fallthru
      _
    %p245 = scmp.le.s32.totalorder 1, %s13
    %p246 = scmp.lt.s32.totalorder %s13, 3
    %p247 = pnand %p245, %p246
    %p248 = pneg %p247
    // Predicated region
    $region45: #{conv_block_forward.1} parent=5 // pred_check
      _
    $region46: #{conv_block_forward.1} parent=5 // pred_check_branch
      %250 = sbr.rel (%p247) target = $region48
    $region47: #{conv_block_forward.1} parent=5 // pred_region
      %s251 = ssub.s32 %s13, 1
      %p252 = scmp.lt.s32.totalorder %s18, 1
      %s253 = scalar_select %p252, %s18, 1
      %s254 = smul.addr %s253, 4
      %s255 = smul.addr %s254, 8
      %s256 = scalar_lea.vmem %s0, %s255
      %p257 = pneg %p39
      %p258 = pneg %p36
      %p259 = pneg %p60
      %p260 = pneg %p57
      %p261 = pneg %p81
      %p262 = pneg %p78
      %p263 = scmp.lt.s32.totalorder %s18, 1
      %s264 = scalar_select %p263, %s18, 1
      %s265 = smul.addr %s264, 8
      %s266 = scalar_lea.vmem %s3, %s265
      %p267 = pneg %p107
      %p268 = pneg %p104
      %p269 = pneg %p128
      %p270 = pneg %p125
      %p271 = pneg %p149
      %p272 = pneg %p146
      %p273 = pneg %p170
      %p274 = pneg %p167
      %p275 = pneg %p196
      %p276 = pneg %p193
      %p277 = scmp.lt.s32.totalorder %s18, 1
      %s278 = scalar_select %p277, %s18, 1
      %s279 = smul.addr %s278, 3
      %s280 = smul.addr %s279, 8
      %s281 = scalar_lea.vmem %s7, %s280
      %p282 = scmp.lt.s32.totalorder %s18, 1
      %s283 = scalar_select %p282, %s18, 1
      %s284 = smul.addr %s283, 4
      %s285 = smul.addr %s284, 8
      %s286 = scalar_lea.vmem %s0, %s285
      %p287 = scmp.lt.s32.totalorder %s18, 1
      %s288 = scalar_select %p287, %s18, 1
      %s289 = smul.addr %s288, 8
      %s290 = scalar_lea.vmem %s3, %s289
      %p291 = scmp.lt.s32.totalorder %s18, 1
      %s292 = scalar_select %p291, %s18, 1
      %s293 = smul.addr %s292, 3
      %s294 = smul.addr %s293, 8
      %s295 = scalar_lea.vmem %s7, %s294
      %v297 = vld [vmem:[%s286] sm:$0xff]
      %v298 = vld [vmem:[%s286 + $0x8] sm:$0xff]
      %v299 = vld [vmem:[%s286 + $0x10] sm:$0xff]
      %v300 = vld [vmem:[%s286 + $0x18] sm:$0xff]
      %305 = vrot.lane.b32.xlu0 %v297, 127
      %v306 = vpop.permute.xlu0 %305
      %307 = vrot.lane.b32.xlu0 %v298, 127
      %v308 = vpop.permute.xlu0 %307
      %309 = vrot.lane.b32.xlu0 %v299, 127
      %v310 = vpop.permute.xlu0 %309
      %311 = vrot.lane.b32.xlu0 %v300, 127
      %v312 = vpop.permute.xlu0 %311
      %vm313 = vcmask 1039360
      %v314 = vsel %vm313, %v306, %v308
      %v315 = vsel %vm313, %v308, %v310
      %v316 = vsel %vm313, %v310, %v312
      %321 = vrot.lane.b32.xlu0 %v297, 126
      %v322 = vpop.permute.xlu0 %321
      %323 = vrot.lane.b32.xlu0 %v298, 126
      %v324 = vpop.permute.xlu0 %323
      %325 = vrot.lane.b32.xlu0 %v299, 126
      %v326 = vpop.permute.xlu0 %325
      %327 = vrot.lane.b32.xlu0 %v300, 126
      %v328 = vpop.permute.xlu0 %327
      %vm329 = vcmask 1031168
      %v330 = vsel %vm329, %v322, %v324
      %v331 = vsel %vm329, %v324, %v326
      %v332 = vsel %vm329, %v326, %v328
      %337 = vrot.lane.b32.xlu0 %v297, 110
      %v338 = vpop.permute.xlu0 %337
      %339 = vrot.lane.b32.xlu0 %v298, 110
      %v340 = vpop.permute.xlu0 %339
      %341 = vrot.lane.b32.xlu0 %v299, 110
      %v342 = vpop.permute.xlu0 %341
      %343 = vrot.lane.b32.xlu0 %v300, 110
      %v344 = vpop.permute.xlu0 %343
      %vm345 = vcmask 900096
      %v346 = vsel %vm345, %v338, %v340
      %v347 = vsel %vm345, %v340, %v342
      %v348 = vsel %vm345, %v342, %v344
      %353 = vrot.lane.b32.xlu0 %v297, 109
      %v354 = vpop.permute.xlu0 %353
      %355 = vrot.lane.b32.xlu0 %v298, 109
      %v356 = vpop.permute.xlu0 %355
      %357 = vrot.lane.b32.xlu0 %v299, 109
      %v358 = vpop.permute.xlu0 %357
      %359 = vrot.lane.b32.xlu0 %v300, 109
      %v360 = vpop.permute.xlu0 %359
      %vm361 = vcmask 891904
      %v362 = vsel %vm361, %v354, %v356
      %v363 = vsel %vm361, %v356, %v358
      %v364 = vsel %vm361, %v358, %v360
      %369 = vrot.lane.b32.xlu0 %v297, 108
      %v370 = vpop.permute.xlu0 %369
      %371 = vrot.lane.b32.xlu0 %v298, 108
      %v372 = vpop.permute.xlu0 %371
      %373 = vrot.lane.b32.xlu0 %v299, 108
      %v374 = vpop.permute.xlu0 %373
      %375 = vrot.lane.b32.xlu0 %v300, 108
      %v376 = vpop.permute.xlu0 %375
      %vm377 = vcmask 883712
      %v378 = vsel %vm377, %v370, %v372
      %v379 = vsel %vm377, %v372, %v374
      %v380 = vsel %vm377, %v374, %v376
      %385 = vrot.lane.b32.xlu0 %v297, 92
      %v386 = vpop.permute.xlu0 %385
      %387 = vrot.lane.b32.xlu0 %v298, 92
      %v388 = vpop.permute.xlu0 %387
      %389 = vrot.lane.b32.xlu0 %v299, 92
      %v390 = vpop.permute.xlu0 %389
      %391 = vrot.lane.b32.xlu0 %v300, 92
      %v392 = vpop.permute.xlu0 %391
      %vm393 = vcmask 752640
      %v394 = vsel %vm393, %v386, %v388
      %v395 = vsel %vm393, %v388, %v390
      %v396 = vsel %vm393, %v390, %v392
      %401 = vrot.lane.b32.xlu0 %v297, 91
      %v402 = vpop.permute.xlu0 %401
      %403 = vrot.lane.b32.xlu0 %v298, 91
      %v404 = vpop.permute.xlu0 %403
      %405 = vrot.lane.b32.xlu0 %v299, 91
      %v406 = vpop.permute.xlu0 %405
      %407 = vrot.lane.b32.xlu0 %v300, 91
      %v408 = vpop.permute.xlu0 %407
      %vm409 = vcmask 744448
      %v410 = vsel %vm409, %v402, %v404
      %v411 = vsel %vm409, %v404, %v406
      %v412 = vsel %vm409, %v406, %v408
      %417 = vrot.lane.b32.xlu0 %v297, 90
      %v418 = vpop.permute.xlu0 %417
      %419 = vrot.lane.b32.xlu0 %v298, 90
      %v420 = vpop.permute.xlu0 %419
      %421 = vrot.lane.b32.xlu0 %v299, 90
      %v422 = vpop.permute.xlu0 %421
      %423 = vrot.lane.b32.xlu0 %v300, 90
      %v424 = vpop.permute.xlu0 %423
      %vm425 = vcmask 736256
      %v426 = vsel %vm425, %v418, %v420
      %v427 = vsel %vm425, %v420, %v422
      %v428 = vsel %vm425, %v422, %v424
      %v433 = vld [vmem:[%s1] sm:$0xf]
      %v434 = vpack.c.bf16 %v314, %v297
      %v435 = vpack.c.bf16 %v315, %v298
      %v436 = vpack.c.bf16 %v316, %v299
      %v437 = vpack.c.bf16 %v312, %v300
      %v438 = vpack.c.bf16 %v346, %v330
      %v439 = vpack.c.bf16 %v347, %v331
      %v440 = vpack.c.bf16 %v348, %v332
      %v441 = vpack.c.bf16 %v344, %v328
      %v442 = vpack.c.bf16 %v378, %v362
      %v443 = vpack.c.bf16 %v379, %v363
      %v444 = vpack.c.bf16 %v380, %v364
      %v445 = vpack.c.bf16 %v376, %v360
      %v446 = vpack.c.bf16 %v410, %v394
      %v447 = vpack.c.bf16 %v411, %v395
      %v448 = vpack.c.bf16 %v412, %v396
      %v449 = vpack.c.bf16 %v408, %v392
      %v450 = vpack.c.bf16 %v426, %v426
      %v451 = vpack.c.bf16 %v427, %v427
      %v452 = vpack.c.bf16 %v428, %v428
      %v453 = vpack.c.bf16 %v424, %v424
      %v454 = vld [vmem:[%s2] sm:$0xff]
      %456 = vset.pattern.permute.xlu0 0
      %457 = vperm.xlu0 %456, %v454
      %v458 = vpop.permute.xlu0 %457
      %480 = vrot.lane.b32.xlu0 %v434, 111
      %v481 = vpop.permute.xlu0 %480
      %482 = vrot.lane.b32.xlu0 %v435, 111
      %v483 = vpop.permute.xlu0 %482
      %484 = vrot.lane.b32.xlu0 %v436, 111
      %v485 = vpop.permute.xlu0 %484
      %486 = vrot.lane.b32.xlu0 %v437, 111
      %v487 = vpop.permute.xlu0 %486
      %488 = vrot.lane.b32.xlu0 %v438, 111
      %v489 = vpop.permute.xlu0 %488
      %490 = vrot.lane.b32.xlu0 %v439, 111
      %v491 = vpop.permute.xlu0 %490
      %492 = vrot.lane.b32.xlu0 %v440, 111
      %v493 = vpop.permute.xlu0 %492
      %494 = vrot.lane.b32.xlu0 %v441, 111
      %v495 = vpop.permute.xlu0 %494
      %496 = vrot.lane.b32.xlu0 %v442, 111
      %v497 = vpop.permute.xlu0 %496
      %498 = vrot.lane.b32.xlu0 %v443, 111
      %v499 = vpop.permute.xlu0 %498
      %500 = vrot.lane.b32.xlu0 %v444, 111
      %v501 = vpop.permute.xlu0 %500
      %502 = vrot.lane.b32.xlu0 %v445, 111
      %v503 = vpop.permute.xlu0 %502
      %504 = vrot.lane.b32.xlu0 %v446, 111
      %v505 = vpop.permute.xlu0 %504
      %506 = vrot.lane.b32.xlu0 %v447, 111
      %v507 = vpop.permute.xlu0 %506
      %508 = vrot.lane.b32.xlu0 %v448, 111
      %v509 = vpop.permute.xlu0 %508
      %510 = vrot.lane.b32.xlu0 %v449, 111
      %v511 = vpop.permute.xlu0 %510
      %512 = vrot.lane.b32.xlu0 %v450, 111
      %v513 = vpop.permute.xlu0 %512
      %514 = vrot.lane.b32.xlu0 %v451, 111
      %v515 = vpop.permute.xlu0 %514
      %516 = vrot.lane.b32.xlu0 %v452, 111
      %v517 = vpop.permute.xlu0 %516
      %518 = vrot.lane.b32.xlu0 %v453, 111
      %v519 = vpop.permute.xlu0 %518
      %vm520 = vcmask 908288
      %v521 = vsel %vm520, %v481, %v483
      %v522 = vsel %vm520, %v483, %v485
      %v523 = vsel %vm520, %v485, %v487
      %v524 = vsel %vm520, %v489, %v491
      %v525 = vsel %vm520, %v491, %v493
      %v526 = vsel %vm520, %v493, %v495
      %v527 = vsel %vm520, %v497, %v499
      %v528 = vsel %vm520, %v499, %v501
      %v529 = vsel %vm520, %v501, %v503
      %v530 = vsel %vm520, %v505, %v507
      %v531 = vsel %vm520, %v507, %v509
      %v532 = vsel %vm520, %v509, %v511
      %v533 = vsel %vm520, %v513, %v515
      %v534 = vsel %vm520, %v515, %v517
      %v535 = vsel %vm520, %v517, %v519
      %vm548 = vcmask 588800
      %v550 = vsel %vm548, %v433, 0
      %vm552 = vcmask 1043456
      %v554 = vsel %vm552, %v533, 0
      %v557 = vsel %vm552, %v534, 0
      %v560 = vsel %vm552, %v535, 0
      %562 = vmatprep.subr.bf16.mxu0 %v522
      %563 = vmatpush1.bf16.msra.mxu0 %v521
      %564 = vmatprep.subr.bf16.mxu0 %v525
      %565 = vmatpush1.bf16.msra.mxu0 %v524
      %566 = vmatprep.subr.bf16.mxu0 %v528
      %567 = vmatpush1.bf16.msra.mxu0 %v527
      %568 = vmatprep.subr.bf16.mxu0 %v531
      %569 = vmatpush1.bf16.msra.mxu0 %v530
      %570 = vmatprep.subr.bf16.mxu0 %v557
      %571 = vmatpush1.bf16.msra.mxu0 %v554
      %572 = vmatprep.subr.bf16.mxu0 0
      %573 = vmatpush1.bf16.msra.mxu0 0
      %574 = vmatprep.subr.bf16.mxu0 0
      %575 = vmatpush1.bf16.msra.mxu0 0
      %576 = vmatprep.subr.bf16.mxu0 0
      %577 = vmatpush1.bf16.msra.mxu0 0
      %578 = vmatprep.subr.bf16.mxu0 0
      %579 = vmatpush1.bf16.msra.mxu0 0
      %580 = vmatprep.subr.bf16.mxu0 0
      %581 = vmatpush1.bf16.msra.mxu0 0
      %582 = vmatprep.subr.bf16.mxu0 0
      %583 = vmatpush1.bf16.msra.mxu0 0
      %584 = vmatprep.subr.bf16.mxu0 0
      %585 = vmatpush1.bf16.msra.mxu0 0
      %586 = vmatprep.subr.bf16.mxu0 0
      %587 = vmatpush1.bf16.msra.mxu0 0
      %588 = vmatprep.subr.bf16.mxu0 0
      %589 = vmatpush1.bf16.msra.mxu0 0
      %590 = vmatprep.subr.bf16.mxu0 0
      %591 = vmatpush1.bf16.msra.mxu0 0
      %592 = vmatprep.subr.bf16.mxu0 0
      %593 = vmatpush1.bf16.msra.mxu0 0
      %594 = vmatprep.mubr.bf16.mxu0 0
      %595 = vmatmul.mubr.bf16.gmra.mrb[0].mxu0 %v550
      %v596 = vpop.f32.mrb[0].mxu0
      %v597 = vadd.f32 %v458, %v596
      %v598 = vpop.f32.mrb[0].mxu0
      %v599 = vadd.f32 %v458, %v598
      %v600 = vpop.f32.mrb[0].mxu0
      %v601 = vpop.f32.mrb[0].mxu0
      %602 = vdwg.mxu0
      %603 = vmatprep.subr.bf16.mxu0 0
      %604 = vmatpush1.bf16.msra.mxu0 %v523
      %605 = vmatprep.subr.bf16.mxu0 0
      %606 = vmatpush1.bf16.msra.mxu0 %v526
      %607 = vmatprep.subr.bf16.mxu0 0
      %608 = vmatpush1.bf16.msra.mxu0 %v529
      %609 = vmatprep.subr.bf16.mxu0 0
      %610 = vmatpush1.bf16.msra.mxu0 %v532
      %611 = vmatprep.subr.bf16.mxu0 0
      %612 = vmatpush1.bf16.msra.mxu0 %v560
      %613 = vmatprep.subr.bf16.mxu0 0
      %614 = vmatpush1.bf16.msra.mxu0 0
      %615 = vmatprep.subr.bf16.mxu0 0
      %616 = vmatpush1.bf16.msra.mxu0 0
      %617 = vmatprep.subr.bf16.mxu0 0
      %618 = vmatpush1.bf16.msra.mxu0 0
      %619 = vmatprep.subr.bf16.mxu0 0
      %620 = vmatpush1.bf16.msra.mxu0 0
      %621 = vmatprep.subr.bf16.mxu0 0
      %622 = vmatpush1.bf16.msra.mxu0 0
      %623 = vmatprep.subr.bf16.mxu0 0
      %624 = vmatpush1.bf16.msra.mxu0 0
      %625 = vmatprep.subr.bf16.mxu0 0
      %626 = vmatpush1.bf16.msra.mxu0 0
      %627 = vmatprep.subr.bf16.mxu0 0
      %628 = vmatpush1.bf16.msra.mxu0 0
      %629 = vmatprep.subr.bf16.mxu0 0
      %630 = vmatpush1.bf16.msra.mxu0 0
      %631 = vmatprep.subr.bf16.mxu0 0
      %632 = vmatpush1.bf16.msra.mxu0 0
      %633 = vmatprep.subr.bf16.mxu0 0
      %634 = vmatpush1.bf16.msra.mxu0 0
      %635 = vmatprep.mubr.bf16.mxu0 0
      %636 = vmatmul.mubr.bf16.gmra.mrb[0].mxu0 %v550
      %v637 = vpop.f32.mrb[0].mxu0
      %v638 = vadd.f32 %v458, %v637
      %v639 = vpop.f32.mrb[0].mxu0
      %v640 = vpop.f32.mrb[0].mxu0
      %v641 = vpop.f32.mrb[0].mxu0
      %642 = vdwg.mxu0
      %v643 = vmax.f32 %v597, 0.0
      %v644 = vmax.f32 %v599, 0.0
      %v645 = vmax.f32 %v638, 0.0
      %v646 = vld [vmem:[%s290] sm:$0xff]
      %648 = vset.pattern.permute.xlu0 0
      %649 = vperm.xlu0 %648, %v646
      %v650 = vpop.permute.xlu0 %649
      %v652 = vadd.f32 %v643, %v650
      %v653 = vadd.f32 %v644, %v650
      %v654 = vadd.f32 %v645, %v650
      %v655 = vld [vmem:[%s6] sm:$0x7]
      %v657 = vlaneseq
      %v658 = vshrl.u32 %v657, 7
      %v659 = vsub.s32 0, %v658
      %v660 = vrot.slane %v655, %v659
      %v661 = vlaneseq
      %v662 = vshrl.u32 %v661, 7
      %v663 = vsub.s32 1, %v662
      %v664 = vrot.slane %v655, %v663
      %v665 = vlaneseq
      %v666 = vshrl.u32 %v665, 7
      %v667 = vsub.s32 2, %v666
      %v668 = vrot.slane %v655, %v667
      %v672 = vmul.f32 %v652, %v660
      %v673 = vmul.f32 %v653, %v664
      %v674 = vmul.f32 %v654, %v668
      %675 = vst [vmem:[#allocation2 + $0x8] sm:$0xff] %v672
      %676 = vst [vmem:[#allocation2 + $0x10] sm:$0xff] %v673
      %677 = vst [vmem:[#allocation2 + $0x18] sm:$0xff] %v674
      %v678 = vld [vmem:[#allocation2] sm:$0xff]
      %v679 = vld [vmem:[#allocation2 + $0x8] sm:$0xff]
      %v680 = vld [vmem:[#allocation2 + $0x10] sm:$0xff]
      %v681 = vld [vmem:[#allocation2 + $0x18] sm:$0xff]
      %v682 = vld [vmem:[#allocation2 + $0x8] sm:$0xff]
      %v683 = vld [vmem:[#allocation2 + $0x10] sm:$0xff]
      %v684 = vld [vmem:[#allocation2 + $0x18] sm:$0xff]
      %v685 = vld [vmem:[#allocation2 + $0x20] sm:$0xff]
      %690 = vrot.lane.b32.xlu0 %v678, 127
      %v691 = vpop.permute.xlu0 %690
      %692 = vrot.lane.b32.xlu0 %v679, 127
      %v693 = vpop.permute.xlu0 %692
      %694 = vrot.lane.b32.xlu0 %v680, 127
      %v695 = vpop.permute.xlu0 %694
      %696 = vrot.lane.b32.xlu0 %v681, 127
      %v697 = vpop.permute.xlu0 %696
      %v698 = vsel %vm313, %v691, %v693
      %v699 = vsel %vm313, %v693, %v695
      %v700 = vsel %vm313, %v695, %v697
      %705 = vrot.lane.b32.xlu0 %v678, 126
      %v706 = vpop.permute.xlu0 %705
      %707 = vrot.lane.b32.xlu0 %v679, 126
      %v708 = vpop.permute.xlu0 %707
      %709 = vrot.lane.b32.xlu0 %v680, 126
      %v710 = vpop.permute.xlu0 %709
      %711 = vrot.lane.b32.xlu0 %v681, 126
      %v712 = vpop.permute.xlu0 %711
      %v713 = vsel %vm329, %v706, %v708
      %v714 = vsel %vm329, %v708, %v710
      %v715 = vsel %vm329, %v710, %v712
      %720 = vrot.lane.b32.xlu0 %v678, 110
      %v721 = vpop.permute.xlu0 %720
      %722 = vrot.lane.b32.xlu0 %v679, 110
      %v723 = vpop.permute.xlu0 %722
      %724 = vrot.lane.b32.xlu0 %v680, 110
      %v725 = vpop.permute.xlu0 %724
      %726 = vrot.lane.b32.xlu0 %v681, 110
      %v727 = vpop.permute.xlu0 %726
      %v728 = vsel %vm345, %v721, %v723
      %v729 = vsel %vm345, %v723, %v725
      %v730 = vsel %vm345, %v725, %v727
      %735 = vrot.lane.b32.xlu0 %v679, 109
      %v736 = vpop.permute.xlu0 %735
      %737 = vrot.lane.b32.xlu0 %v680, 109
      %v738 = vpop.permute.xlu0 %737
      %739 = vrot.lane.b32.xlu0 %v681, 109
      %v740 = vpop.permute.xlu0 %739
      %v741 = vsel %vm361, %v736, %v738
      %v742 = vsel %vm361, %v738, %v740
      %751 = vrot.lane.b32.xlu0 %v682, 108
      %v752 = vpop.permute.xlu0 %751
      %753 = vrot.lane.b32.xlu0 %v683, 108
      %v754 = vpop.permute.xlu0 %753
      %755 = vrot.lane.b32.xlu0 %v684, 108
      %v756 = vpop.permute.xlu0 %755
      %757 = vrot.lane.b32.xlu0 %v685, 108
      %v758 = vpop.permute.xlu0 %757
      %v759 = vsel %vm377, %v752, %v754
      %v760 = vsel %vm377, %v754, %v756
      %v761 = vsel %vm377, %v756, %v758
      %766 = vrot.lane.b32.xlu0 %v682, 92
      %v767 = vpop.permute.xlu0 %766
      %768 = vrot.lane.b32.xlu0 %v683, 92
      %v769 = vpop.permute.xlu0 %768
      %770 = vrot.lane.b32.xlu0 %v684, 92
      %v771 = vpop.permute.xlu0 %770
      %772 = vrot.lane.b32.xlu0 %v685, 92
      %v773 = vpop.permute.xlu0 %772
      %v774 = vsel %vm393, %v767, %v769
      %v775 = vsel %vm393, %v769, %v771
      %v776 = vsel %vm393, %v771, %v773
      %781 = vrot.lane.b32.xlu0 %v682, 91
      %v782 = vpop.permute.xlu0 %781
      %783 = vrot.lane.b32.xlu0 %v683, 91
      %v784 = vpop.permute.xlu0 %783
      %785 = vrot.lane.b32.xlu0 %v684, 91
      %v786 = vpop.permute.xlu0 %785
      %787 = vrot.lane.b32.xlu0 %v685, 91
      %v788 = vpop.permute.xlu0 %787
      %v789 = vsel %vm409, %v782, %v784
      %v790 = vsel %vm409, %v784, %v786
      %v791 = vsel %vm409, %v786, %v788
      %796 = vrot.lane.b32.xlu0 %v682, 90
      %v797 = vpop.permute.xlu0 %796
      %798 = vrot.lane.b32.xlu0 %v683, 90
      %v799 = vpop.permute.xlu0 %798
      %800 = vrot.lane.b32.xlu0 %v684, 90
      %v801 = vpop.permute.xlu0 %800
      %802 = vrot.lane.b32.xlu0 %v685, 90
      %v803 = vpop.permute.xlu0 %802
      %v804 = vsel %vm425, %v797, %v799
      %v805 = vsel %vm425, %v799, %v801
      %v806 = vsel %vm425, %v801, %v803
      %v811 = vld [vmem:[%s4] sm:$0xf]
      %v812 = vpack.c.bf16 %v698, %v678
      %v813 = vpack.c.bf16 %v699, %v679
      %v814 = vpack.c.bf16 %v700, %v680
      %v815 = vpack.c.bf16 %v697, %v681
      %v816 = vpack.c.bf16 %v728, %v713
      %v817 = vpack.c.bf16 %v729, %v714
      %v818 = vpack.c.bf16 %v730, %v715
      %v819 = vpack.c.bf16 %v727, %v712
      %v820 = vpack.c.bf16 %v752, %v736
      %v821 = vpack.c.bf16 %v759, %v741
      %v822 = vpack.c.bf16 %v760, %v742
      %v823 = vpack.c.bf16 %v761, %v740
      %v824 = vpack.c.bf16 %v782, %v767
      %v825 = vpack.c.bf16 %v789, %v774
      %v826 = vpack.c.bf16 %v790, %v775
      %v827 = vpack.c.bf16 %v791, %v776
      %v828 = vpack.c.bf16 %v797, %v797
      %v829 = vpack.c.bf16 %v804, %v804
      %v830 = vpack.c.bf16 %v805, %v805
      %v831 = vpack.c.bf16 %v806, %v806
      %v832 = vld [vmem:[%s5] sm:$0xff]
      %834 = vset.pattern.permute.xlu0 0
      %835 = vperm.xlu0 %834, %v832
      %v836 = vpop.permute.xlu0 %835
      %858 = vrot.lane.b32.xlu0 %v812, 19
      %v859 = vpop.permute.xlu0 %858
      %860 = vrot.lane.b32.xlu0 %v813, 19
      %v861 = vpop.permute.xlu0 %860
      %862 = vrot.lane.b32.xlu0 %v814, 19
      %v863 = vpop.permute.xlu0 %862
      %864 = vrot.lane.b32.xlu0 %v815, 19
      %v865 = vpop.permute.xlu0 %864
      %866 = vrot.lane.b32.xlu0 %v816, 19
      %v867 = vpop.permute.xlu0 %866
      %868 = vrot.lane.b32.xlu0 %v817, 19
      %v869 = vpop.permute.xlu0 %868
      %870 = vrot.lane.b32.xlu0 %v818, 19
      %v871 = vpop.permute.xlu0 %870
      %872 = vrot.lane.b32.xlu0 %v819, 19
      %v873 = vpop.permute.xlu0 %872
      %874 = vrot.lane.b32.xlu0 %v820, 19
      %v875 = vpop.permute.xlu0 %874
      %876 = vrot.lane.b32.xlu0 %v821, 19
      %v877 = vpop.permute.xlu0 %876
      %878 = vrot.lane.b32.xlu0 %v822, 19
      %v879 = vpop.permute.xlu0 %878
      %880 = vrot.lane.b32.xlu0 %v823, 19
      %v881 = vpop.permute.xlu0 %880
      %882 = vrot.lane.b32.xlu0 %v824, 19
      %v883 = vpop.permute.xlu0 %882
      %884 = vrot.lane.b32.xlu0 %v825, 19
      %v885 = vpop.permute.xlu0 %884
      %886 = vrot.lane.b32.xlu0 %v826, 19
      %v887 = vpop.permute.xlu0 %886
      %888 = vrot.lane.b32.xlu0 %v827, 19
      %v889 = vpop.permute.xlu0 %888
      %890 = vrot.lane.b32.xlu0 %v828, 19
      %v891 = vpop.permute.xlu0 %890
      %892 = vrot.lane.b32.xlu0 %v829, 19
      %v893 = vpop.permute.xlu0 %892
      %894 = vrot.lane.b32.xlu0 %v830, 19
      %v895 = vpop.permute.xlu0 %894
      %896 = vrot.lane.b32.xlu0 %v831, 19
      %v897 = vpop.permute.xlu0 %896
      %vm898 = vcmask 154624
      %v899 = vsel %vm898, %v859, %v861
      %v900 = vsel %vm898, %v861, %v863
      %v901 = vsel %vm898, %v863, %v865
      %v902 = vsel %vm898, %v867, %v869
      %v903 = vsel %vm898, %v869, %v871
      %v904 = vsel %vm898, %v871, %v873
      %v905 = vsel %vm898, %v875, %v877
      %v906 = vsel %vm898, %v877, %v879
      %v907 = vsel %vm898, %v879, %v881
      %v908 = vsel %vm898, %v883, %v885
      %v909 = vsel %vm898, %v885, %v887
      %v910 = vsel %vm898, %v887, %v889
      %v911 = vsel %vm898, %v891, %v893
      %v912 = vsel %vm898, %v893, %v895
      %v913 = vsel %vm898, %v895, %v897
      %v927 = vsel %vm548, %v811, 0
      %v930 = vsel %vm552, %v911, 0
      %v933 = vsel %vm552, %v912, 0
      %v936 = vsel %vm552, %v913, 0
      %938 = vmatprep.subr.bf16.mxu0 %v900
      %939 = vmatpush1.bf16.msra.mxu0 %v899
      %940 = vmatprep.subr.bf16.mxu0 %v903
      %941 = vmatpush1.bf16.msra.mxu0 %v902
      %942 = vmatprep.subr.bf16.mxu0 %v906
      %943 = vmatpush1.bf16.msra.mxu0 %v905
      %944 = vmatprep.subr.bf16.mxu0 %v909
      %945 = vmatpush1.bf16.msra.mxu0 %v908
      %946 = vmatprep.subr.bf16.mxu0 %v933
      %947 = vmatpush1.bf16.msra.mxu0 %v930
      %948 = vmatprep.subr.bf16.mxu0 0
      %949 = vmatpush1.bf16.msra.mxu0 0
      %950 = vmatprep.subr.bf16.mxu0 0
      %951 = vmatpush1.bf16.msra.mxu0 0
      %952 = vmatprep.subr.bf16.mxu0 0
      %953 = vmatpush1.bf16.msra.mxu0 0
      %954 = vmatprep.subr.bf16.mxu0 0
      %955 = vmatpush1.bf16.msra.mxu0 0
      %956 = vmatprep.subr.bf16.mxu0 0
      %957 = vmatpush1.bf16.msra.mxu0 0
      %958 = vmatprep.subr.bf16.mxu0 0
      %959 = vmatpush1.bf16.msra.mxu0 0
      %960 = vmatprep.subr.bf16.mxu0 0
      %961 = vmatpush1.bf16.msra.mxu0 0
      %962 = vmatprep.subr.bf16.mxu0 0
      %963 = vmatpush1.bf16.msra.mxu0 0
      %964 = vmatprep.subr.bf16.mxu0 0
      %965 = vmatpush1.bf16.msra.mxu0 0
      %966 = vmatprep.subr.bf16.mxu0 0
      %967 = vmatpush1.bf16.msra.mxu0 0
      %968 = vmatprep.subr.bf16.mxu0 0
      %969 = vmatpush1.bf16.msra.mxu0 0
      %970 = vmatprep.mubr.bf16.mxu0 0
      %971 = vmatmul.mubr.bf16.gmra.mrb[0].mxu0 %v927
      %v972 = vpop.f32.mrb[0].mxu0
      %v973 = vadd.f32 %v836, %v972
      %v974 = vpop.f32.mrb[0].mxu0
      %v975 = vadd.f32 %v836, %v974
      %v976 = vpop.f32.mrb[0].mxu0
      %v977 = vpop.f32.mrb[0].mxu0
      %978 = vdwg.mxu0
      %979 = vmatprep.subr.bf16.mxu0 0
      %980 = vmatpush1.bf16.msra.mxu0 %v901
      %981 = vmatprep.subr.bf16.mxu0 0
      %982 = vmatpush1.bf16.msra.mxu0 %v904
      %983 = vmatprep.subr.bf16.mxu0 0
      %984 = vmatpush1.bf16.msra.mxu0 %v907
      %985 = vmatprep.subr.bf16.mxu0 0
      %986 = vmatpush1.bf16.msra.mxu0 %v910
      %987 = vmatprep.subr.bf16.mxu0 0
      %988 = vmatpush1.bf16.msra.mxu0 %v936
      %989 = vmatprep.subr.bf16.mxu0 0
      %990 = vmatpush1.bf16.msra.mxu0 0
      %991 = vmatprep.subr.bf16.mxu0 0
      %992 = vmatpush1.bf16.msra.mxu0 0
      %993 = vmatprep.subr.bf16.mxu0 0
      %994 = vmatpush1.bf16.msra.mxu0 0
      %995 = vmatprep.subr.bf16.mxu0 0
      %996 = vmatpush1.bf16.msra.mxu0 0
      %997 = vmatprep.subr.bf16.mxu0 0
      %998 = vmatpush1.bf16.msra.mxu0 0
      %999 = vmatprep.subr.bf16.mxu0 0
      %1000 = vmatpush1.bf16.msra.mxu0 0
      %1001 = vmatprep.subr.bf16.mxu0 0
      %1002 = vmatpush1.bf16.msra.mxu0 0
      %1003 = vmatprep.subr.bf16.mxu0 0
      %1004 = vmatpush1.bf16.msra.mxu0 0
      %1005 = vmatprep.subr.bf16.mxu0 0
      %1006 = vmatpush1.bf16.msra.mxu0 0
      %1007 = vmatprep.subr.bf16.mxu0 0
      %1008 = vmatpush1.bf16.msra.mxu0 0
      %1009 = vmatprep.subr.bf16.mxu0 0
      %1010 = vmatpush1.bf16.msra.mxu0 0
      %1011 = vmatprep.mubr.bf16.mxu0 0
      %1012 = vmatmul.mubr.bf16.gmra.mrb[0].mxu0 %v927
      %v1013 = vpop.f32.mrb[0].mxu0
      %v1014 = vadd.f32 %v836, %v1013
      %v1015 = vpop.f32.mrb[0].mxu0
      %v1016 = vpop.f32.mrb[0].mxu0
      %v1017 = vpop.f32.mrb[0].mxu0
      %1018 = vdwg.mxu0
      %v1019 = vmax.f32 %v973, 0.0
      %v1020 = vmax.f32 %v975, 0.0
      %v1021 = vmax.f32 %v1014, 0.0
      %1022 = vst [vmem:[%s295] sm:$0xff] %v1019
      %1023 = vst [vmem:[%s295 + $0x8] sm:$0xff] %v1020
      %1024 = vst [vmem:[%s295 + $0x10] sm:$0xff] %v1021
      %p1025 = scmp.lt.s32.totalorder %s18, 1
      %s1026 = scalar_select %p1025, %s18, 1
      %s1027 = smul.addr %s1026, 3
      %s1028 = smul.addr %s1027, 8
      %s1029 = scalar_lea.vmem %s7, %s1028
      // Predicated region
      $region49: #{conv_block_forward.1} parent=47 // pred_check
        %p1030 = pneg %p193
      $region50: #{conv_block_forward.1} parent=47 // pred_check_branch
        %1032 = sbr.rel (%p1030) target = $region52
      $region51: #{conv_block_forward.1} parent=47 // pred_region
        _
      $region52: #{conv_block_forward.1} parent=47 // pred_fallthru
        _
    $region48: #{conv_block_forward.1} parent=5 // pred_fallthru
      _
    %p1033 = scmp.le.s32.totalorder 2, %s13
    // Predicated region
    $region53: #{conv_block_forward.1} parent=5 // pred_check
      %p1034 = pneg %p1033
    $region54: #{conv_block_forward.1} parent=5 // pred_check_branch
      %1036 = sbr.rel (%p1034) target = $region56
    $region55: #{conv_block_forward.1} parent=5 // pred_region
      %s1037 = ssub.s32 %s13, 2
      // Predicated region
      $region57: #{conv_block_forward.1} parent=55 // pred_check
        %p1038 = pneg %p199
      $region58: #{conv_block_forward.1} parent=55 // pred_check_branch
        %1040 = sbr.rel (%p1038) target = $region60
      $region59: #{conv_block_forward.1} parent=55 // pred_region
        %p1041 = scmp.lt.s32.totalorder %s19, 1
        %s1042 = scalar_select %p1041, %s19, 1
        %s1043 = smul.addr %s1042, 3
        %s1044 = smul.addr %s1043, 8
        %s1045 = scalar_lea.vmem %s7, %s1044
      $region60: #{conv_block_forward.1} parent=55 // pred_fallthru
        _
    $region56: #{conv_block_forward.1} parent=5 // pred_fallthru
      _
  $region6: #{conv_block_forward.1} parent=0 // loop_footer
    %s17 = sadd.s32 1, %s13
  $region7: #{conv_block_forward.1} parent=0 // loop_footer_branch
    %12 = sbr.rel target = $region3
  $region8: #{conv_block_forward.1} parent=0 // loop_exit
    _

</llo_original>
